<compile_context>
chip_gen: v6e
topology: v6e:2x2x1
jax: 0.10.0
libtpu: 0.0.40
codegen_flags: <defaults>
</compile_context>

<pallas_src>
import functools
import math

import jax
import jax.numpy as jnp
from jax.experimental import pallas as pl
from jax.experimental.pallas import tpu as pltpu


_VMEM_LIMIT_BYTES = 32 * 1024 * 1024   # safe on v5e/v6e (128 MiB phys) and v7x (64 MiB phys)
_S_BYTES_CAP = 4 * 1024 * 1024         # cap for the block-diagonal ones matrix (bf16)


def _transcendental_dtype(x_dtype):
    """bf16 log/exp only where the EUP has native bf16 (v6e/v7x) and input is bf16."""
    if jnp.dtype(x_dtype) != jnp.dtype(jnp.bfloat16):
        return jnp.float32
    try:
        kind = jax.devices()[0].device_kind.lower()
    except Exception:
        kind = ""
    if ("v6" in kind) or ("v7" in kind) or ("7x" in kind):
        return jnp.bfloat16
    return jnp.float32  # v5e (and older): no bf16 EUP/VPU -> keep transcendentals in f32


def _row_tile(rows, bytes_per_row, sub, target_tile_bytes):
    """Row (sublane) tile: dtype-native alignment, VMEM budget, >= 2 blocks when possible."""
    if rows <= sub:
        return rows                                   # full-dim block is always legal
    cap = max(sub, target_tile_bytes // bytes_per_row // sub * sub)
    tm = max(sub, min(cap, rows // sub * sub))
    if rows >= 2 * sub:
        # keep at least 2 row blocks so both v7x TensorCores get work
        half = -(-rows // 2)
        half = -(-half // sub) * sub
        tm = min(tm, half)
    return max(sub, tm)


# --------------------------------------------------------------------------
# Path A kernel: packed lane-dense rows (G channels per row), MXU segmented sum
# --------------------------------------------------------------------------
def gem_packed_kernel(p_ref, x_ref, s_ref, o_ref, *, eps, hw, trans_dtype, split_matmul):
    # p_ref: SMEM (1,) learnable exponent
    # x_ref: VMEM (TM, G*HW) packed input rows
    # s_ref: VMEM (G*HW, G) block-diagonal ones matrix (bf16, fetched once)
    # o_ref: VMEM (TM, G) lane-dense output block
    p = p_ref[0]
    x = x_ref[...]

    def finish(xp_f32):
        s = s_ref[...]
        hi = xp_f32.astype(jnp.bfloat16)
        sums = jnp.dot(hi, s, preferred_element_type=jnp.float32)
        if split_matmul:
            # hi+lo bf16 split reproduces ~f32 accuracy with 2 MXU passes.
            lo = (xp_f32 - hi.astype(jnp.float32)).astype(jnp.bfloat16)
            sums = sums + jnp.dot(lo, s, preferred_element_type=jnp.float32)
        m = sums * (1.0 / hw)                          # mean over H*W per channel
        o_ref[...] = jnp.exp(jnp.log(m) * (1.0 / p)).astype(o_ref.dtype)

    @pl.when(p == 3.0)
    def _pow3():                                       # GeM default: pure-VPU cube, EUP idle
        xc = jnp.maximum(x.astype(jnp.float32), eps)
        finish(xc * xc * xc)

    @pl.when(p != 3.0)
    def _pow_general():                                # learnable p: exp(p*log(x)) on the EUP
        xc = jnp.maximum(x.astype(trans_dtype), eps)
        xp = jnp.exp(p.astype(trans_dtype) * jnp.log(xc))
        finish(xp.astype(jnp.float32))


# --------------------------------------------------------------------------
# Path B kernel: one channel per row, lane-axis reduction with f32 accumulator
# --------------------------------------------------------------------------
def gem_rows_kernel(p_ref, x_ref, o_ref, acc_ref, *, eps, hw, tk, needs_mask, trans_dtype):
    k = pl.program_id(1)
    nk = pl.num_programs(1)

    @pl.when(k == 0)
    def _init():
        acc_ref[...] = jnp.zeros_like(acc_ref)

    p = p_ref[0]
    x = x_ref[...]

    def accum(xp_f32):
        if needs_mask:
            # Rare fallback only (huge, non-128-divisible H*W that also can't be
            # packed): zero the lanes of the overhanging tail tile before summing.
            col = k * tk + jax.lax.broadcasted_iota(jnp.int32, xp_f32.shape, 1)
            xp_f32 = jnp.where(col < hw, xp_f32, 0.0)
        acc_ref[...] += jnp.sum(xp_f32, axis=-1, keepdims=True)

    @pl.when(p == 3.0)
    def _pow3():                                       # runtime-gated VPU fast path
        xc = jnp.maximum(x.astype(jnp.float32), eps)
        accum(xc * xc * xc)

    @pl.when(p != 3.0)
    def _pow_general():
        xc = jnp.maximum(x.astype(trans_dtype), eps)
        accum(jnp.exp(p.astype(trans_dtype) * jnp.log(xc)).astype(jnp.float32))

    @pl.when(k == nk - 1)
    def _finalize():
        m = acc_ref[...] * (1.0 / hw)
        o_ref[...] = jnp.exp(jnp.log(m) * (1.0 / p)).astype(o_ref.dtype)


# --------------------------------------------------------------------------
# Wrapper
# --------------------------------------------------------------------------
def gem_pallas(x, p, eps=1e-6, target_tile_bytes=2 * 1024 * 1024):
    """GeM pooling.  x: (N, C, H, W) f32/bf16, p: (1,) f32.  Returns (N, C, 1, 1) in x.dtype."""
    N, C, H, W = x.shape
    NC, HW = N * C, H * W
    itemsize = jnp.dtype(x.dtype).itemsize
    sub = 8 if itemsize >= 4 else 16                   # dtype-native sublane packing
    trans_dtype = _transcendental_dtype(x.dtype)
    p = jnp.asarray(p, jnp.float32).reshape((1,))

    # ---- Path A: packed, lane-dense (typical GeM spatial maps: 7x7, 14x14, ...) ----
    g0 = 128 // math.gcd(HW, 128)                      # min channels/row for 128-aligned lanes
    if HW % 128 != 0 and NC % g0 == 0:
        G = g0
        L = G * HW                                     # lanes per packed row (multiple of 128)
        s_bytes = L * G * 2                            # bf16 ones matrix
        if L * itemsize * sub <= target_tile_bytes and s_bytes <= _S_BYTES_CAP:
            R = NC // G
            x2 = x.reshape(R, L)                       # pure view of NCHW-contiguous data
            TM = _row_tile(R, L * itemsize, sub, target_tile_bytes)
            seg = jnp.repeat(jnp.arange(G, dtype=jnp.int32), HW)
            S = (seg[:, None] == jnp.arange(G, dtype=jnp.int32)[None, :]).astype(jnp.bfloat16)

            kernel = functools.partial(
                gem_packed_kernel, eps=float(eps), hw=HW,
                trans_dtype=trans_dtype, split_matmul=(itemsize >= 4))
            out = pl.pallas_call(
                kernel,
                out_shape=jax.ShapeDtypeStruct((R, G), x.dtype),
                grid=(int(pl.cdiv(R, TM)),),
                in_specs=[
                    pl.BlockSpec(memory_space=pltpu.SMEM),            # p (scalar param)
                    pl.BlockSpec((TM, L), lambda i: (i, 0)),          # packed input rows
                    pl.BlockSpec((L, G), lambda i: (0, 0)),           # ones matrix (fetched once)
                ],
                out_specs=pl.BlockSpec((TM, G), lambda i: (i, 0)),    # lane-dense output
                compiler_params=pltpu.CompilerParams(
                    dimension_semantics=("parallel",),
                    vmem_limit_bytes=_VMEM_LIMIT_BYTES),
                cost_estimate=pl.CostEstimate(
                    flops=2 * NC * HW * G * (2 if itemsize >= 4 else 1) + 4 * NC * HW,
                    transcendentals=2 * NC * HW + 2 * NC,
                    bytes_accessed=NC * HW * itemsize + s_bytes + NC * itemsize),
            )(p, x2, S)
            return out.reshape(N, C, 1, 1)

    # ---- Path B: one channel per row (H*W already 128-aligned, or fallback) ----
    x2 = x.reshape(NC, HW)                             # pure view
    lane_budget = max(128, target_tile_bytes // (sub * itemsize))   # elements per row tile
    if HW <= lane_budget:
        TK, nk, needs_mask = HW, 1, False              # whole spatial map per block
    elif HW % 128 == 0:
        TK = 128                                       # largest 128-multiple divisor in budget
        cand = 256
        while cand <= lane_budget:
            if HW % cand == 0:
                TK = cand
            cand += 128
        nk, needs_mask = HW // TK, False
    else:
        TK = max(128, lane_budget // 128 * 128)        # rare: huge unaligned HW -> masked tail
        nk, needs_mask = int(pl.cdiv(HW, TK)), (HW % TK != 0)

    TM = _row_tile(NC, TK * itemsize, sub, target_tile_bytes)
    kernel = functools.partial(
        gem_rows_kernel, eps=float(eps), hw=HW, tk=int(TK),
        needs_mask=needs_mask, trans_dtype=trans_dtype)
    out = pl.pallas_call(
        kernel,
        out_shape=jax.ShapeDtypeStruct((NC, 1), x.dtype),
        grid=(int(pl.cdiv(NC, TM)), nk),               # row blocks may overhang NC (no pad copy)
        in_specs=[
            pl.BlockSpec(memory_space=pltpu.SMEM),                   # p (scalar param)
            pl.BlockSpec((TM, TK), lambda i, k: (i, k)),             # x tile
        ],
        out_specs=pl.BlockSpec((TM, 1), lambda i, k: (i, 0)),        # resident across k
        scratch_shapes=[pltpu.VMEM((TM, 1), jnp.float32)],
        compiler_params=pltpu.CompilerParams(
            dimension_semantics=("parallel", "arbitrary"),
            vmem_limit_bytes=_VMEM_LIMIT_BYTES),
        cost_estimate=pl.CostEstimate(
            flops=4 * NC * HW,
            transcendentals=2 * NC * HW + 2 * NC,
            bytes_accessed=NC * HW * itemsize + NC * itemsize),
    )(p, x2)
    return out.reshape(N, C, 1, 1)


def gem_reference(x, p, eps=1e-6):
    # Pure-JAX reference of F.avg_pool2d(x.clamp(min=eps).pow(p), (H, W)).pow(1/p)
    xc = jnp.maximum(x.astype(jnp.float32), eps)
    xp = xc ** p[0]
    m = jnp.mean(xp, axis=(-2, -1), keepdims=True)
    return m ** (1.0 / p[0])


if __name__ == "__main__":
    key = jax.random.PRNGKey(0)
    k1, k2 = jax.random.split(key)
    eps = 1e-6

    p3 = jnp.ones((1,), dtype=jnp.float32) * 3.0       # GeM.__init__ default
    p25 = jnp.ones((1,), dtype=jnp.float32) * 2.5      # non-integer learnable exponent

    def check(xin, pin, rtol, atol):
        out = jax.block_until_ready(gem_pallas(xin, pin, eps))
        ref = gem_reference(xin, pin, eps)
        assert out.shape == xin.shape[:2] + (1, 1), out.shape
        assert out.dtype == xin.dtype, out.dtype
        err = float(jnp.max(jnp.abs(out.astype(jnp.float32) - ref)))
        assert jnp.allclose(out.astype(jnp.float32), ref, rtol=rtol, atol=atol), err

    # Row path (H*W = 256 is 128-aligned): f32 / bf16, default p=3 (VPU cube) and general p.
    x = jax.random.uniform(k1, (2, 4, 16, 16), dtype=jnp.float32)
    check(x, p3, 1e-5, 1e-6)
    check(x, p25, 1e-5, 1e-6)
    check(x.astype(jnp.bfloat16), p3, 2e-2, 2e-2)
    check(x.astype(jnp.bfloat16), p25, 2e-2, 2e-2)

    # Packed path (typical GeM spatial 7x7 = 49): lane-dense compute + MXU segmented sum.
    xp_ = jax.random.uniform(k2, (2, 512, 7, 7), dtype=jnp.float32)
    check(xp_, p3, 1e-4, 1e-5)
    check(xp_, p25, 1e-4, 1e-5)
    check(xp_.astype(jnp.bfloat16), p3, 2e-2, 2e-2)

    print("KERNEL_OK")
</pallas_src>

<mosaic_0001>
module attributes {stable_mosaic.version = 11 : i64} {
  func.func @gem_rows_kernel(%arg0: i32, %arg1: i32, %arg2: memref<1xf32, #tpu.memory_space<smem>>, %arg3: memref<8x256xf32, #tpu.memory_space<vmem>>, %arg4: memref<8x1xf32, #tpu.memory_space<vmem>>, %arg5: memref<8x1xf32, #tpu.memory_space<vmem>>) attributes {dimension_semantics = [#tpu.dimension_semantics<parallel>, #tpu.dimension_semantics<arbitrary>], iteration_bounds = array<i64: 1, 1>, scalar_prefetch = 0 : i64, scratch_operands = 1 : i64, tpu.core_type = #tpu.core_type<tc>, window_params = [{transform_indices = @transform_0, window_bounds = array<i64: 1>}, {transform_indices = @transform_1, window_bounds = array<i64: 8, 256>}, {transform_indices = @transform_2, window_bounds = array<i64: 8, 1>}]} {
    %c0_i32 = arith.constant 0 : i32
    %0 = arith.cmpi eq, %arg1, %c0_i32 : i32
    %1 = arith.extui %0 : i1 to i32
    %c0_i32_0 = arith.constant 0 : i32
    %2 = arith.cmpi ne, %1, %c0_i32_0 : i32
    scf.if %2 {
      %cst_8 = arith.constant 0.000000e+00 : f32
      %14 = vector.broadcast %cst_8 : f32 to vector<8x1xf32>
      %c0_9 = arith.constant 0 : index
      %c0_10 = arith.constant 0 : index
      %15 = vector.load %arg5[%c0_9, %c0_10] : memref<8x1xf32, #tpu.memory_space<vmem>>, vector<8x1xf32>
      tpu.vector_store %arg5[%c0_9, %c0_10], %14 {strides = array<i32>} : memref<8x1xf32, #tpu.memory_space<vmem>>, vector<8x1xf32>,
    } else {
    }
    %c0 = arith.constant 0 : index
    %3 = memref.load %arg2[%c0] : memref<1xf32, #tpu.memory_space<smem>>
    %c0_1 = arith.constant 0 : index
    %c0_2 = arith.constant 0 : index
    %4 = vector.load %arg3[%c0_1, %c0_2] : memref<8x256xf32, #tpu.memory_space<vmem>>, vector<8x256xf32>
    %cst = arith.constant 3.000000e+00 : f32
    %5 = arith.cmpf oeq, %3, %cst : f32
    %6 = arith.extui %5 : i1 to i32
    %c0_i32_3 = arith.constant 0 : i32
    %7 = arith.cmpi ne, %6, %c0_i32_3 : i32
    scf.if %7 {
      %cst_8 = arith.constant 9.99999997E-7 : f32
      %14 = vector.broadcast %cst_8 : f32 to vector<8x256xf32>
      %15 = arith.maximumf %4, %14 : vector<8x256xf32>
      %16 = arith.mulf %15, %15 : vector<8x256xf32>
      %17 = arith.mulf %16, %15 : vector<8x256xf32>
      %c0_9 = arith.constant 0 : index
      %c0_10 = arith.constant 0 : index
      %18 = vector.load %arg5[%c0_9, %c0_10] : memref<8x1xf32, #tpu.memory_space<vmem>>, vector<8x1xf32>
      %cst_11 = arith.constant dense<0.000000e+00> : vector<8xf32>
      %19 = vector.multi_reduction <add>, %17, %cst_11 [1] : vector<8x256xf32> to vector<8xf32>
      %20 = vector.shape_cast %19 : vector<8xf32> to vector<8x1xf32>
      %21 = arith.addf %18, %20 : vector<8x1xf32>
      %c0_12 = arith.constant 0 : index
      %c0_13 = arith.constant 0 : index
      %22 = vector.load %arg5[%c0_12, %c0_13] : memref<8x1xf32, #tpu.memory_space<vmem>>, vector<8x1xf32>
      tpu.vector_store %arg5[%c0_12, %c0_13], %21 {strides = array<i32>} : memref<8x1xf32, #tpu.memory_space<vmem>>, vector<8x1xf32>,
    } else {
    }
    %cst_4 = arith.constant 3.000000e+00 : f32
    %8 = arith.cmpf one, %3, %cst_4 : f32
    %9 = arith.extui %8 : i1 to i32
    %c0_i32_5 = arith.constant 0 : i32
    %10 = arith.cmpi ne, %9, %c0_i32_5 : i32
    scf.if %10 {
      %cst_8 = arith.constant 9.99999997E-7 : f32
      %14 = vector.broadcast %cst_8 : f32 to vector<8x256xf32>
      %15 = arith.maximumf %4, %14 : vector<8x256xf32>
      %16 = math.log %15 : vector<8x256xf32>
      %17 = vector.broadcast %3 : f32 to vector<8x256xf32>
      %18 = arith.mulf %17, %16 : vector<8x256xf32>
      %19 = math.exp %18 : vector<8x256xf32>
      %c0_9 = arith.constant 0 : index
      %c0_10 = arith.constant 0 : index
      %20 = vector.load %arg5[%c0_9, %c0_10] : memref<8x1xf32, #tpu.memory_space<vmem>>, vector<8x1xf32>
      %cst_11 = arith.constant dense<0.000000e+00> : vector<8xf32>
      %21 = vector.multi_reduction <add>, %19, %cst_11 [1] : vector<8x256xf32> to vector<8xf32>
      %22 = vector.shape_cast %21 : vector<8xf32> to vector<8x1xf32>
      %23 = arith.addf %20, %22 : vector<8x1xf32>
      %c0_12 = arith.constant 0 : index
      %c0_13 = arith.constant 0 : index
      %24 = vector.load %arg5[%c0_12, %c0_13] : memref<8x1xf32, #tpu.memory_space<vmem>>, vector<8x1xf32>
      tpu.vector_store %arg5[%c0_12, %c0_13], %23 {strides = array<i32>} : memref<8x1xf32, #tpu.memory_space<vmem>>, vector<8x1xf32>,
    } else {
    }
    %c0_i32_6 = arith.constant 0 : i32
    %11 = arith.cmpi eq, %arg1, %c0_i32_6 : i32
    %12 = arith.extui %11 : i1 to i32
    %c0_i32_7 = arith.constant 0 : i32
    %13 = arith.cmpi ne, %12, %c0_i32_7 : i32
    scf.if %13 {
      %c0_8 = arith.constant 0 : index
      %c0_9 = arith.constant 0 : index
      %14 = vector.load %arg5[%c0_8, %c0_9] : memref<8x1xf32, #tpu.memory_space<vmem>>, vector<8x1xf32>
      %cst_10 = arith.constant 3.906250e-03 : f32
      %15 = vector.broadcast %cst_10 : f32 to vector<8x1xf32>
      %16 = arith.mulf %14, %15 : vector<8x1xf32>
      %17 = math.log %16 : vector<8x1xf32>
      %cst_11 = arith.constant 1.000000e+00 : f32
      %18 = arith.divf %cst_11, %3 : f32
      %19 = vector.broadcast %18 : f32 to vector<8x1xf32>
      %20 = arith.mulf %17, %19 : vector<8x1xf32>
      %21 = math.exp %20 : vector<8x1xf32>
      %c0_12 = arith.constant 0 : index
      %c0_13 = arith.constant 0 : index
      %22 = vector.load %arg4[%c0_12, %c0_13] : memref<8x1xf32, #tpu.memory_space<vmem>>, vector<8x1xf32>
      tpu.vector_store %arg4[%c0_12, %c0_13], %21 {strides = array<i32>} : memref<8x1xf32, #tpu.memory_space<vmem>>, vector<8x1xf32>,
    } else {
    }
    return
  }
  func.func @transform_0(%arg0: i32, %arg1: i32) -> i32 {
    %c0_i32 = arith.constant 0 : i32
    %c0_i32_0 = arith.constant 0 : i32
    return %c0_i32 : i32
  }
  func.func @transform_1(%arg0: i32, %arg1: i32) -> (i32, i32) {
    %c0_i32 = arith.constant 0 : i32
    return %arg0, %arg1 : i32, i32
  }
  func.func @transform_2(%arg0: i32, %arg1: i32) -> (i32, i32) {
    %c0_i32 = arith.constant 0 : i32
    %c0_i32_0 = arith.constant 0 : i32
    return %arg0, %c0_i32 : i32, i32
  }
}

</mosaic_0001>

<llo_original>
// kernel: tpu_custom_call.1
$region0: #{tpu_custom_call.1}
  #allocation0 [shape = 'u32[]', space=smem, size = 0x4, offset = 0x4, fixed_abs, tag = 'smem constant byte address 0x4 - core index']
  #allocation1 [shape = 'u32[144,128]{1,0:T(1,128)}', space=vmem, size = 0x12000, scoped, tag = 'internal scratch']
  #allocation2 [shape = 'f32[8,1]{1,0:T(8,128)}', space=vmem, size = 0x1000, scoped, tag = 'scratch operand']
  #allocation3 [shape = 'f32[1]{0:T(128)S(6)}', space=smem, size = 0x200, scoped, tag = 'scoped memory for tpu_custom_call.1']
  %s0 = inlined_call_operand.<no memory space> [shape: f32[1], index: 0, kind: input, shape index: {}]
  %s1 = inlined_call_operand.hbm [shape: f32[8,256], index: 1, kind: input, shape index: {}]
  %s2 = inlined_call_operand.vmem [shape: f32[8,1], index: 2, kind: output, shape index: {}]
  %s3 = sld [smem:[#allocation0]]
  $region38: #{tpu_custom_call.1} parent=0
    _
  %s5 = ssub.s32 1, %s3
  %s6 = scalar_select 0, %s5, %s3
  %7 = sst [smem:[#allocation3]] %s0
  $region1: #{tpu_custom_call.1} parent=0
    #allocation4 [shape = 'u8[8192]{0}', space=vmem, size = 0x2000, scoped, tag = 'input window, operand 1, single buffered']
    #allocation5 [shape = 's32[1]{0}', space=sflag, size = 0x4, scoped, tag = 'scoped memory for tpu_custom_call.1']
    %8 = vsyncpa [#allocation5], 0
    // Predicated region
    $region2: #{tpu_custom_call.1} parent=1 // pred_check
      _
    $region3: #{tpu_custom_call.1} parent=1 // pred_check_branch
      %10 = sbr.rel (0) target = $region5
    $region4: #{tpu_custom_call.1} parent=1 // pred_region
      _
    $region5: #{tpu_custom_call.1} parent=1 // pred_fallthru
      _
    // Predicated region
    $region6: #{tpu_custom_call.1} parent=1 // pred_check
      _
    $region7: #{tpu_custom_call.1} parent=1 // pred_check_branch
      %12 = sbr.rel (0) target = $region9
    $region8: #{tpu_custom_call.1} parent=1 // pred_region
      %s14 = ssub.s32 256, 256
      %15 = vsyncadd [#allocation5], %s14
      %s17 = sshll.u32 [#allocation4], 4
      %s18 = int_to_ptr.vmem [resolvable:$true] %s17
      %20 = dma.hbm_to_vmem [thread:$0]  %s1, 256, %s18, [#allocation5]
    $region9: #{tpu_custom_call.1} parent=1 // pred_fallthru
      _
    // Predicated region
    $region10: #{tpu_custom_call.1} parent=1 // pred_check
      _
    $region11: #{tpu_custom_call.1} parent=1 // pred_check_branch
      %22 = sbr.rel (0) target = $region13
    $region12: #{tpu_custom_call.1} parent=1 // pred_region
      %23 = dma.done [#allocation5], 256
    $region13: #{tpu_custom_call.1} parent=1 // pred_fallthru
      _
    %p24 = scmp.eq.s32.totalorder 0, 0
    // Predicated region
    $region14: #{tpu_custom_call.1} parent=1 // pred_check
      %p25 = pneg %p24
    $region15: #{tpu_custom_call.1} parent=1 // pred_check_branch
      %27 = sbr.rel (%p25) target = $region17
    $region16: #{tpu_custom_call.1} parent=1 // pred_region
      %vm28 = vcmask 7168
      %29 = vst.msk [vmem:[#allocation2] sm:$0xff] %vm28, 0.0
    $region17: #{tpu_custom_call.1} parent=1 // pred_fallthru
      _
    %s30 = sld [smem:[#allocation3]]
    %v31 = vld [vmem:[#allocation4] sm:$0xff]
    %v32 = vld [vmem:[#allocation4 + $0x8] sm:$0xff]
    %p33 = scmp.eq.f32.partialorder %s30, 3.0
    // Predicated region
    $region18: #{tpu_custom_call.1} parent=1 // pred_check
      %p34 = pneg %p33
    $region19: #{tpu_custom_call.1} parent=1 // pred_check_branch
      %36 = sbr.rel (%p34) target = $region21
    $region20: #{tpu_custom_call.1} parent=1 // pred_region
      %v37 = vmax.f32 %v31, 1e-06
      %v38 = vmax.f32 %v32, 1e-06
      %v39 = vmul.f32 %v37, %v37
      %v40 = vmul.f32 %v38, %v38
      %v41 = vmul.f32 %v39, %v37
      %v42 = vmul.f32 %v40, %v38
      %v43 = vld [vmem:[#allocation2] sm:$0xff]
      %v44 = vadd.f32 %v41, %v42
      %45 = vadd.xlane.f32.xlu0 %v44
      %v46 = vpop.xlane.xlu0 %45
      %v47 = vadd.f32 %v43, %v46
      %vm48 = vcmask 7168
      %49 = vst.msk [vmem:[#allocation2] sm:$0xff] %vm48, %v47
    $region21: #{tpu_custom_call.1} parent=1 // pred_fallthru
      _
    %p50 = scmp.ne.f32.partialorder %s30, 3.0
    // Predicated region
    $region22: #{tpu_custom_call.1} parent=1 // pred_check
      %p51 = pneg %p50
    $region23: #{tpu_custom_call.1} parent=1 // pred_check_branch
      %53 = sbr.rel (%p51) target = $region25
    $region24: #{tpu_custom_call.1} parent=1 // pred_region
      %v54 = vmax.f32 %v31, 1e-06
      %v55 = vmax.f32 %v32, 1e-06
      %v56 = vlog2.pop %v54
      %v57 = vmul.f32 %v56, 0.6931472
      %v58 = vlog2.pop %v55
      %v59 = vmul.f32 %v58, 0.6931472
      %v60 = vstv %s30
      %v61 = vmul.f32 %v60, %v57
      %v62 = vmul.f32 %v60, %v59
      %v63 = vmul.f32 %v61, 1.442695
      %v64 = vpow.pop %v63
      %v65 = vmul.f32 %v62, 1.442695
      %v66 = vpow.pop %v65
      %v67 = vld [vmem:[#allocation2] sm:$0xff]
      %v68 = vadd.f32 %v64, %v66
      %69 = vadd.xlane.f32.xlu0 %v68
      %v70 = vpop.xlane.xlu0 %69
      %v71 = vadd.f32 %v67, %v70
      %vm72 = vcmask 7168
      %73 = vst.msk [vmem:[#allocation2] sm:$0xff] %vm72, %v71
    $region25: #{tpu_custom_call.1} parent=1 // pred_fallthru
      _
    // Predicated region
    $region26: #{tpu_custom_call.1} parent=1 // pred_check
      %p74 = pneg %p24
    $region27: #{tpu_custom_call.1} parent=1 // pred_check_branch
      %76 = sbr.rel (%p74) target = $region29
    $region28: #{tpu_custom_call.1} parent=1 // pred_region
      %v77 = vld [vmem:[#allocation2] sm:$0xff]
      %v78 = vmul.f32 %v77, 0.00390625
      %v79 = vlog2.pop %v78
      %v80 = vmul.f32 %v79, 0.6931472
      %v81 = vstv %s30
      %v82 = vrcp.pop %v81
      %s83 = vtos %v82
      %v84 = vstv %s83
      %v85 = vmul.f32 %v80, %v84
      %v86 = vmul.f32 %v85, 1.442695
      %v87 = vpow.pop %v86
      %vm88 = vcmask 7168
      %89 = vst.msk [vmem:[%s2] sm:$0xff] %vm88, %v87
    $region29: #{tpu_custom_call.1} parent=1 // pred_fallthru
      _
    // Predicated region
    $region30: #{tpu_custom_call.1} parent=1 // pred_check
      _
    $region31: #{tpu_custom_call.1} parent=1 // pred_check_branch
      %91 = sbr.rel (0) target = $region33
    $region32: #{tpu_custom_call.1} parent=1 // pred_region
      _
    $region33: #{tpu_custom_call.1} parent=1 // pred_fallthru
      _
    // Predicated region
    $region34: #{tpu_custom_call.1} parent=1 // pred_check
      _
    $region35: #{tpu_custom_call.1} parent=1 // pred_check_branch
      %93 = sbr.rel (0) target = $region37
    $region36: #{tpu_custom_call.1} parent=1 // pred_region
      _
    $region37: #{tpu_custom_call.1} parent=1 // pred_fallthru
      _
    %94 = vsyncpa [#allocation5], 1

</llo_original>
